<compile_context>
chip_gen: v5e
topology: v5e:2x2
jax: 0.10.0
libtpu: 0.0.40
codegen_flags: <defaults>
</compile_context>

<pallas_src>
import functools

import jax
import jax.numpy as jnp
from jax.experimental import pallas as pl
from jax.experimental.pallas import tpu as pltpu

NUM_CLASSES = 5
C_PAD = 128          # lane-dense padded class dim (one vreg lane width); do NOT widen to 256
PAD_NEG = -1e30      # bias pad for unused class columns: never wins max, exp -> 0
N_PART_MAX = 2       # partial-sum groups for the CE reduction (v7x has 2 TensorCores)

_TARGET_X_BLOCK_BYTES = 4 << 20   # ~4 MiB x block per grid step
_VMEM_BUDGET_BYTES = 20 << 20     # double-buffered x + weight stay under this
_VMEM_LIMIT_BYTES = 32 << 20      # explicit scoped-VMEM limit (<= physical on v5e/v6e/v7x)


# ---------------------------------------------------------------------------
# Kernel 1: linear forward (inference). Stores only the 5 real class columns.
# ---------------------------------------------------------------------------
def _linear_kernel(x_ref, wt_ref, b_ref, out_ref):
    logits = jnp.dot(x_ref[...], wt_ref[...], preferred_element_type=jnp.float32)
    out_ref[...] = logits[:, :NUM_CLASSES] + b_ref[:, :NUM_CLASSES]


# ---------------------------------------------------------------------------
# Kernel 2: fused linear + cross-entropy (training):
#   loss = (1/B) * sum_i [ logsumexp(logits_i[:5]) - logits_i[y_i] ]
# 2D grid (group, batch-block): per-row losses accumulate in a VMEM scratch,
# each group writes one (8,128) partial-sum tile at its last batch block.
# ---------------------------------------------------------------------------
def _ce_kernel(x_ref, wt_ref, b_ref, y_ref, part_ref, acc_ref, *, num_rows, g_inner):
    o = pl.program_id(0)
    i = pl.program_id(1)
    tm = x_ref.shape[0]

    @pl.when(i == 0)
    def _init():
        acc_ref[...] = jnp.zeros_like(acc_ref)

    logits = jnp.dot(x_ref[...], wt_ref[...], preferred_element_type=jnp.float32)
    logits = logits + b_ref[...]                                    # (tm, C_PAD); pad cols ~ -1e30

    # Numerically stable log-sum-exp; padded columns vanish via the -1e30 bias pad.
    m = jnp.max(logits, axis=-1, keepdims=True)                     # (tm, 1)
    lse = m + jnp.log(jnp.sum(jnp.exp(logits - m), axis=-1, keepdims=True))

    # Gather logits at the target class via one-hot compare (labels (tm, 1) int32,
    # values in [0, NUM_CLASSES) so padded columns can never match).
    col = jax.lax.broadcasted_iota(jnp.int32, logits.shape, 1)      # (tm, C_PAD)
    picked = jnp.sum(jnp.where(col == y_ref[...], logits, 0.0), axis=-1, keepdims=True)

    # Mask rows past the true batch (tail of the last real block + padded blocks).
    blk = o * g_inner + i                                           # unclamped linear block index
    row = jax.lax.broadcasted_iota(jnp.int32, (tm, 1), 0) + blk * tm
    acc_ref[...] += jnp.where(row < num_rows, lse - picked, 0.0)    # pure VPU add per step

    @pl.when(i == g_inner - 1)
    def _finalize():
        part_ref[...] = jnp.broadcast_to(jnp.sum(acc_ref[...]), part_ref.shape)


# ---------------------------------------------------------------------------
# Wrappers
# ---------------------------------------------------------------------------
def _pick_tm(batch, d):
    """Rows per block: ~_TARGET_X_BLOCK_BYTES of f32 x, multiple of 8, VMEM-guarded."""
    b_pad = max(8, -(-batch // 8) * 8)
    bytes_per_row = d * 4
    rows = max(8, (_TARGET_X_BLOCK_BYTES // bytes_per_row) // 8 * 8)
    w_bytes = 2 * d * C_PAD * 4                     # double-buffered (D, 128) f32 weight
    avail = _VMEM_BUDGET_BYTES - w_bytes            # room left for double-buffered x
    # TODO(synk): if avail <= 0 (huge input_size), tile D on a K grid axis instead.
    max_rows = max(8, (avail // (2 * bytes_per_row)) // 8 * 8) if avail > 0 else 8
    return min(rows, max_rows, b_pad)


def _pad_params(weight, bias):
    """weight: (NUM_CLASSES, D) as in nn.Linear; bias: (NUM_CLASSES,).
    Returns lane-dense padded transposed weight (D, C_PAD) and bias row (1, C_PAD)
    whose padded columns hold PAD_NEG (neutralizes them in the CE softmax)."""
    c, d = weight.shape
    w_t = jnp.zeros((d, C_PAD), jnp.float32).at[:, :c].set(weight.T.astype(jnp.float32))
    b_row = jnp.full((1, C_PAD), PAD_NEG, jnp.float32).at[:, :c].set(bias.astype(jnp.float32))
    return w_t, b_row


def prepare_params(weight, bias):
    """Pad/transpose the nn.Linear parameters ONCE; reuse across forward calls."""
    return _pad_params(weight, bias)


def linear_forward(x, w_t_pad, b_pad):
    B, D = x.shape
    tm = _pick_tm(B, D)
    cost = pl.CostEstimate(
        flops=2 * B * D * C_PAD,
        transcendentals=0,
        bytes_accessed=B * D * 4 + D * C_PAD * 4 + B * NUM_CLASSES * 4,
    )
    return pl.pallas_call(
        _linear_kernel,
        out_shape=jax.ShapeDtypeStruct((B, NUM_CLASSES), jnp.float32),
        grid=(pl.cdiv(B, tm),),
        in_specs=[
            pl.BlockSpec((tm, D), lambda i: (i, 0)),
            pl.BlockSpec((D, C_PAD), lambda i: (0, 0)),
            pl.BlockSpec((1, C_PAD), lambda i: (0, 0)),
        ],
        out_specs=pl.BlockSpec((tm, NUM_CLASSES), lambda i: (i, 0)),
        compiler_params=pltpu.CompilerParams(
            dimension_semantics=("parallel",),
            vmem_limit_bytes=_VMEM_LIMIT_BYTES,
        ),
        cost_estimate=cost,
    )(x, w_t_pad, b_pad)


def cross_entropy_forward(x, w_t_pad, b_pad, y):
    B, D = x.shape
    tm = _pick_tm(B, D)
    num_blocks = pl.cdiv(B, tm)
    n_part = min(N_PART_MAX, num_blocks)            # parallel partial-sum groups (v7x: 2 TCs)
    g_inner = pl.cdiv(num_blocks, n_part)
    y = y.reshape(B, 1).astype(jnp.int32)           # intentional int64 -> int32 narrowing

    if num_blocks % n_part == 0:
        def blk_map(o, i):
            return (o * g_inner + i, 0)
    else:
        # Ragged split: clamp padded steps to the last real block; their rows are
        # masked out in-kernel by the row < num_rows test.
        def blk_map(o, i):
            return (jnp.minimum(o * g_inner + i, num_blocks - 1), 0)

    kernel = functools.partial(_ce_kernel, num_rows=B, g_inner=g_inner)
    cost = pl.CostEstimate(
        flops=2 * B * D * C_PAD + 8 * B * C_PAD,
        transcendentals=B * C_PAD + B,
        bytes_accessed=B * D * 4 + D * C_PAD * 4 + B * 4 + n_part * 8 * C_PAD * 4,
    )
    partials = pl.pallas_call(
        kernel,
        out_shape=jax.ShapeDtypeStruct((n_part * 8, C_PAD), jnp.float32),
        grid=(n_part, g_inner),
        in_specs=[
            pl.BlockSpec((tm, D), blk_map),
            pl.BlockSpec((D, C_PAD), lambda o, i: (0, 0)),
            pl.BlockSpec((1, C_PAD), lambda o, i: (0, 0)),
            pl.BlockSpec((tm, 1), blk_map),
        ],
        out_specs=pl.BlockSpec((8, C_PAD), lambda o, i: (o, 0)),
        scratch_shapes=[pltpu.VMEM((tm, 1), jnp.float32)],
        compiler_params=pltpu.CompilerParams(
            dimension_semantics=("parallel", "arbitrary"),
            vmem_limit_bytes=_VMEM_LIMIT_BYTES,
        ),
        cost_estimate=cost,
    )(x, w_t_pad, b_pad, y)
    # Each group's (8,128) tile holds its partial sum replicated; pick one element per group.
    return partials[0::8, 0].sum() / B


def torch_model_forward(x, params, y=None):
    """Mirrors TorchModel.forward: logits if y is None, else mean CE loss.
    `params` comes from prepare_params(weight, bias) (padding hoisted out of the call)."""
    w_t_pad, b_pad = params
    if y is not None:
        return cross_entropy_forward(x, w_t_pad, b_pad, y)
    return linear_forward(x, w_t_pad, b_pad)


# ---------------------------------------------------------------------------
# Main
# ---------------------------------------------------------------------------
if __name__ == "__main__":
    key = jax.random.PRNGKey(0)
    k_x, k_w, k_b, k_y = jax.random.split(key, 4)

    batch = 8
    input_size = 32

    # Deterministic parameter init (shapes match nn.Linear(input_size, 5)).
    weight = jax.random.normal(k_w, (NUM_CLASSES, input_size), jnp.float32) * 0.1
    bias = jax.random.normal(k_b, (NUM_CLASSES,), jnp.float32) * 0.1

    x = jax.random.normal(k_x, (batch, input_size), jnp.float32)
    y = jax.random.randint(k_y, (batch, 1), 0, NUM_CLASSES, jnp.int32)

    params = prepare_params(weight, bias)   # pad/transpose once, reused below

    # Inference path: logits (B, 5) written directly (no padded HBM write + slice)
    logits = jax.block_until_ready(torch_model_forward(x, params))

    # Training path: cross-entropy loss (single fused kernel launch)
    loss = jax.block_until_ready(torch_model_forward(x, params, y))

    # Sanity check against pure-JAX reference
    ref_logits = x @ weight.T + bias
    ref_lse = jax.nn.logsumexp(ref_logits, axis=-1)
    ref_picked = jnp.take_along_axis(ref_logits, y, axis=-1)[:, 0]
    ref_loss = jnp.mean(ref_lse - ref_picked)

    assert logits.shape == (batch, NUM_CLASSES)
    assert jnp.allclose(logits, ref_logits, atol=1e-5), "logits mismatch"
    assert jnp.allclose(loss, ref_loss, atol=1e-5), "loss mismatch"

    print("KERNEL_OK")
</pallas_src>

<mosaic_0001>
module attributes {stable_mosaic.version = 11 : i64} {
  func.func @_linear_kernel(%arg0: i32, %arg1: memref<8x32xf32, #tpu.memory_space<vmem>>, %arg2: memref<32x128xf32, #tpu.memory_space<vmem>>, %arg3: memref<1x128xf32, #tpu.memory_space<vmem>>, %arg4: memref<8x5xf32, #tpu.memory_space<vmem>>) attributes {dimension_semantics = [#tpu.dimension_semantics<parallel>], iteration_bounds = array<i64: 1>, scalar_prefetch = 0 : i64, scratch_operands = 0 : i64, tpu.core_type = #tpu.core_type<tc>, window_params = [{transform_indices = @transform_0, window_bounds = array<i64: 8, 32>}, {pipeline_mode = #tpu.pipeline_mode<synchronous>, transform_indices = @transform_1, window_bounds = array<i64: 32, 128>}, {pipeline_mode = #tpu.pipeline_mode<synchronous>, transform_indices = @transform_2, window_bounds = array<i64: 1, 128>}, {transform_indices = @transform_3, window_bounds = array<i64: 8, 5>}]} {
    %c0 = arith.constant 0 : index
    %c0_0 = arith.constant 0 : index
    %0 = vector.load %arg1[%c0, %c0_0] : memref<8x32xf32, #tpu.memory_space<vmem>>, vector<8x32xf32>
    %c0_1 = arith.constant 0 : index
    %c0_2 = arith.constant 0 : index
    %1 = vector.load %arg2[%c0_1, %c0_2] : memref<32x128xf32, #tpu.memory_space<vmem>>, vector<32x128xf32>
    %cst = arith.constant dense<0.000000e+00> : vector<8x128xf32>
    %2 = tpu.matmul %0, %1, %cst {dimension_numbers = #tpu.dot_dimension_numbers<[1], [0], [0], [1], [0, 0, 1, 1], [], []>} : vector<8x32xf32>, vector<32x128xf32>, vector<8x128xf32> -> vector<8x128xf32>
    %3 = vector.extract_strided_slice %2 {offsets = [0, 0], sizes = [8, 5], strides = [1, 1]} : vector<8x128xf32> to vector<8x5xf32>
    %c0_3 = arith.constant 0 : index
    %c0_4 = arith.constant 0 : index
    %4 = vector.load %arg3[%c0_3, %c0_4] : memref<1x128xf32, #tpu.memory_space<vmem>>, vector<1x5xf32>
    %5 = vector.broadcast %4 : vector<1x5xf32> to vector<8x5xf32>
    %6 = arith.addf %3, %5 : vector<8x5xf32>
    %c0_5 = arith.constant 0 : index
    %c0_6 = arith.constant 0 : index
    %7 = vector.load %arg4[%c0_5, %c0_6] : memref<8x5xf32, #tpu.memory_space<vmem>>, vector<8x5xf32>
    tpu.vector_store %arg4[%c0_5, %c0_6], %6 {strides = array<i32>} : memref<8x5xf32, #tpu.memory_space<vmem>>, vector<8x5xf32>,
    return
  }
  func.func @transform_0(%arg0: i32) -> (i32, i32) {
    %c0_i32 = arith.constant 0 : i32
    %c0_i32_0 = arith.constant 0 : i32
    return %arg0, %c0_i32 : i32, i32
  }
  func.func @transform_1(%arg0: i32) -> (i32, i32) {
    %c0_i32 = arith.constant 0 : i32
    %c0_i32_0 = arith.constant 0 : i32
    %c0_i32_1 = arith.constant 0 : i32
    return %c0_i32, %c0_i32_0 : i32, i32
  }
  func.func @transform_2(%arg0: i32) -> (i32, i32) {
    %c0_i32 = arith.constant 0 : i32
    %c0_i32_0 = arith.constant 0 : i32
    %c0_i32_1 = arith.constant 0 : i32
    return %c0_i32, %c0_i32_0 : i32, i32
  }
  func.func @transform_3(%arg0: i32) -> (i32, i32) {
    %c0_i32 = arith.constant 0 : i32
    %c0_i32_0 = arith.constant 0 : i32
    return %arg0, %c0_i32 : i32, i32
  }
}

</mosaic_0001>

<llo_original>
// kernel: tpu_custom_call.1
$region0: #{tpu_custom_call.1}
  #allocation0 [shape = 'u32[]', space=smem, size = 0x4, offset = 0x4, fixed_abs, tag = 'smem constant byte address 0x4 - core index']
  #allocation1 [shape = 'u32[72,128]{1,0:T(1,128)}', space=vmem, size = 0x9000, scoped, tag = 'internal scratch']
  %s0 = inlined_call_operand.hbm [shape: f32[8,32], index: 0, kind: input, shape index: {}]
  %s1 = inlined_call_operand.hbm [shape: f32[32,128], index: 1, kind: input, shape index: {}]
  %s2 = inlined_call_operand.vmem [shape: f32[1,128], index: 2, kind: input, shape index: {}]
  %s3 = inlined_call_operand.hbm [shape: f32[8,5], index: 3, kind: output, shape index: {}]
  %s4 = sld [smem:[#allocation0]]
  $region30: #{tpu_custom_call.1} parent=0
    _
  %s6 = ssub.s32 1, %s4
  %s7 = scalar_select 0, %s6, %s4
  $region1: #{tpu_custom_call.1} parent=0
    #allocation2 [shape = 'u8[4096]{0}', space=vmem, size = 0x1000, scoped, tag = 'input window, operand 0, single buffered']
    #allocation3 [shape = 's32[1]{0}', space=sflag, size = 0x4, scoped, tag = 'scoped memory for tpu_custom_call.1']
    #allocation4 [shape = 's32[1]{0}', space=sflag, size = 0x4, scoped, tag = 'scoped memory for tpu_custom_call.1']
    #allocation5 [shape = 'u8[16384]{0}', space=vmem, size = 0x4000, scoped, tag = 'input window, operand 1, single buffered']
    #allocation6 [shape = 's32[1]{0}', space=sflag, size = 0x4, scoped, tag = 'scoped memory for tpu_custom_call.1']
    #allocation7 [shape = 'u8[4096]{0}', space=vmem, size = 0x1000, scoped, tag = 'output window, operand 0, single buffered']
    %8 = vsyncpa [#allocation3], 0
    %9 = vsyncpa [#allocation6], 0
    %10 = vsyncpa [#allocation4], 0
    // Predicated region
    $region2: #{tpu_custom_call.1} parent=1 // pred_check
      _
    $region3: #{tpu_custom_call.1} parent=1 // pred_check_branch
      %12 = sbr.rel (0) target = $region5
    $region4: #{tpu_custom_call.1} parent=1 // pred_region
      %14 = vsyncadd [#allocation3], 0
      %s16 = sshll.u32 %s0, 4
      %s17 = int_to_ptr.hbm [resolvable:$true] %s16
      %s18 = sshll.u32 [#allocation2], 4
      %s19 = int_to_ptr.vmem [resolvable:$true] %s18
      %21 = dma.hbm_to_vmem [thread:$0]  %s17, 128, %s19, [#allocation3]
    $region5: #{tpu_custom_call.1} parent=1 // pred_fallthru
      _
    // Predicated region
    $region6: #{tpu_custom_call.1} parent=1 // pred_check
      _
    $region7: #{tpu_custom_call.1} parent=1 // pred_check_branch
      %23 = sbr.rel (0) target = $region9
    $region8: #{tpu_custom_call.1} parent=1 // pred_region
      %25 = vsyncadd [#allocation6], 0
      %s26 = sshll.u32 %s1, 4
      %s27 = int_to_ptr.hbm [resolvable:$true] %s26
      %s28 = sshll.u32 [#allocation5], 4
      %s29 = int_to_ptr.vmem [resolvable:$true] %s28
      %34 = dma.hbm_to_vmem [thread:$0]  %s27, 512, %s29, [#allocation6], 128, 128, 8
    $region9: #{tpu_custom_call.1} parent=1 // pred_fallthru
      _
    // Predicated region
    $region10: #{tpu_custom_call.1} parent=1 // pred_check
      _
    $region11: #{tpu_custom_call.1} parent=1 // pred_check_branch
      %36 = sbr.rel (0) target = $region13
    $region12: #{tpu_custom_call.1} parent=1 // pred_region
      _
    $region13: #{tpu_custom_call.1} parent=1 // pred_fallthru
      _
    // Predicated region
    $region14: #{tpu_custom_call.1} parent=1 // pred_check
      _
    $region15: #{tpu_custom_call.1} parent=1 // pred_check_branch
      %38 = sbr.rel (0) target = $region17
    $region16: #{tpu_custom_call.1} parent=1 // pred_region
      %40 = dma.done [#allocation3], 128
    $region17: #{tpu_custom_call.1} parent=1 // pred_fallthru
      _
    // Predicated region
    $region18: #{tpu_custom_call.1} parent=1 // pred_check
      _
    $region19: #{tpu_custom_call.1} parent=1 // pred_check_branch
      %42 = sbr.rel (0) target = $region21
    $region20: #{tpu_custom_call.1} parent=1 // pred_region
      %44 = dma.done [#allocation6], 512
    $region21: #{tpu_custom_call.1} parent=1 // pred_fallthru
      _
    %v45 = vld [vmem:[#allocation2] sm:$0xff]
    %v46 = vld [vmem:[#allocation5] sm:$0xff]
    %v47 = vld [vmem:[#allocation5 + $0x8] sm:$0xff]
    %v48 = vld [vmem:[#allocation5 + $0x10] sm:$0xff]
    %v49 = vld [vmem:[#allocation5 + $0x18] sm:$0xff]
    %vm50 = vcmask 261120
    %v52 = vsel %vm50, %v45, 0
    %54 = vmatpush.msra.mxu0 0.0
    %55 = vmatpush.msra.mxu0 0.0
    %56 = vmatpush.msra.mxu0 0.0
    %57 = vmatpush.msra.mxu0 0.0
    %58 = vmatpush.msra.mxu0 0.0
    %59 = vmatpush.msra.mxu0 0.0
    %60 = vmatpush.msra.mxu0 0.0
    %61 = vmatpush.msra.mxu0 0.0
    %62 = vmatpush.msra.mxu0 0.0
    %63 = vmatpush.msra.mxu0 0.0
    %64 = vmatpush.msra.mxu0 0.0
    %65 = vmatpush.msra.mxu0 0.0
    %66 = vmatpush.msra.mxu0 %v49
    %67 = vmatpush.msra.mxu0 %v48
    %68 = vmatpush.msra.mxu0 %v47
    %69 = vmatpush.msra.mxu0 %v46
    %70 = vmatmul.f32.gmra.mxu0 %v52
    %v71 = vpop.f32.mrf.mxu0
    %v72 = vadd.f32 0.0, %v71
    %73 = vdwg.mxu0
    %v74 = vld [vmem:[%s2] sm:$0x1]
    %v76 = vperm.slane %v74, 0
    %v78 = vadd.f32 %v72, %v76
    %vm79 = vcmask 39936
    %80 = vst.msk [vmem:[#allocation7] sm:$0xff] %vm79, %v78
    // Predicated region
    $region22: #{tpu_custom_call.1} parent=1 // pred_check
      _
    $region23: #{tpu_custom_call.1} parent=1 // pred_check_branch
      %82 = sbr.rel (0) target = $region25
    $region24: #{tpu_custom_call.1} parent=1 // pred_region
      %84 = vsyncadd [#allocation4], 0
      %s86 = sshll.u32 [#allocation7], 4
      %s87 = int_to_ptr.vmem [resolvable:$true] %s86
      %s88 = sshll.u32 %s3, 4
      %s89 = int_to_ptr.hbm [resolvable:$true] %s88
      %91 = dma.vmem_to_hbm [thread:$0]  %s87, 128, %s89, [#allocation4]
    $region25: #{tpu_custom_call.1} parent=1 // pred_fallthru
      _
    // Predicated region
    $region26: #{tpu_custom_call.1} parent=1 // pred_check
      _
    $region27: #{tpu_custom_call.1} parent=1 // pred_check_branch
      %93 = sbr.rel (0) target = $region29
    $region28: #{tpu_custom_call.1} parent=1 // pred_region
      %95 = dma.done [#allocation4], 128
    $region29: #{tpu_custom_call.1} parent=1 // pred_fallthru
      _
    %96 = vsyncpa [#allocation3], 1
    %97 = vsyncpa [#allocation6], 1
    %98 = vsyncpa [#allocation4], 1

</llo_original>
